<compile_context>
chip_gen: v6e
topology: v6e:2x2x1
jax: 0.10.0
libtpu: 0.0.40
codegen_flags: <defaults>
</compile_context>

<pallas_src>
import jax
import jax.numpy as jnp
from jax.experimental import pallas as pl
from jax.experimental.pallas import tpu as pltpu


def _head_pool_kernel(x_ref, w_ref, bias_ref, out_ref):
    # x_ref:    (Nb, HW, C_in)  bf16  batch-block of the input, channels on lanes
    # w_ref:    (C_in, cb)      bf16  folded 1x1 conv weight, C_out tile on lanes
    # bias_ref: (1, cb)         f32   folded BN bias = beta - mean * scale (lane-dense)
    # out_ref:  (Nb, cb)        f32   spatially mean-pooled features (lane-dense)
    nb, hw, c_in = x_ref.shape

    # Free merge of the leading dims (wrapper guarantees HW % 8 == 0 whenever Nb > 1).
    x = x_ref[...].reshape(nb * hw, c_in)

    # 1x1 conv == channel matmul on the MXU; bf16 operands, f32 accumulation,
    # C_out on the output-lane/column axis.
    y = jnp.dot(x, w_ref[...], preferred_element_type=jnp.float32)     # (Nb*HW, cb)

    # BatchNorm affine (scale already folded into w) + MemoryEfficientSwish, in f32.
    y = y + bias_ref[...]
    y = y * jax.nn.sigmoid(y)

    # AdaptiveAvgPool2d(1) == mean over the spatial (sublane) axis per batch element.
    out_ref[...] = jnp.mean(y.reshape(nb, hw, y.shape[-1]), axis=1)    # (Nb, cb)


def class_model_forward(x_nchw, conv_w, bn_gamma, bn_beta, bn_mean, bn_var,
                        fc_w, fc_b, bn_eps=1e-3, cout_blocks=1, batch_block=4):
    """x_nchw: (N, C_in, H, W) float32. Returns logits (N, num_classes).

    bn_eps defaults to 1e-3 (EfficientNet's batch_norm_epsilon); pass the checkpoint's
    value if it differs (PyTorch BatchNorm2d default would be 1e-5).
    cout_blocks=1 is right for v5e/v6e and for v7x at moderate N; use cout_blocks>1 on
    v7x only when N is tiny and the second TensorCore would otherwise idle.
    """
    N, C_in, H, W = x_nchw.shape
    C_out = conv_w.shape[0]
    HW = H * W

    # C_out tile split.  cb is now the lane/output-column dim, so it must be a multiple
    # of 128 (or the full C_out); fall back to a single block otherwise.
    if cout_blocks > 1 and (C_out % cout_blocks != 0 or (C_out // cout_blocks) % 128 != 0):
        cout_blocks = 1
    cb = C_out // cout_blocks

    # Batch block: amortizes per-grid-step overhead.  Needs HW % 8 == 0 for the free
    # in-kernel (Nb,HW,Cin)->(Nb*HW,Cin) merge, and must divide N.
    nb = max(1, batch_block)
    if HW % 8 != 0:
        nb = 1
    while N % nb != 0:
        nb -= 1
    n_blocks = N // nb

    # NCHW -> (N, HW, C_in) bf16: the transpose and the bf16 cast fuse into one XLA
    # pass over the activation; this puts C_out on the MXU output-lane axis in-kernel.
    x = jnp.transpose(x_nchw.reshape(N, C_in, HW), (0, 2, 1)).astype(jnp.bfloat16)

    # Fold BatchNorm (inference, running stats) in f32: scale into the (transposed)
    # weight, bias as a lane-dense f32 row.
    scale = bn_gamma / jnp.sqrt(bn_var + bn_eps)                              # (C_out,)
    w = (conv_w.reshape(C_out, C_in) * scale[:, None]).T.astype(jnp.bfloat16)  # (C_in, C_out)
    bias = (bn_beta - bn_mean * scale).reshape(1, C_out).astype(jnp.float32)   # (1, C_out)

    pooled = pl.pallas_call(
        _head_pool_kernel,
        out_shape=jax.ShapeDtypeStruct((N, C_out), jnp.float32),
        grid_spec=pltpu.PrefetchScalarGridSpec(
            num_scalar_prefetch=0,
            grid=(cout_blocks, n_blocks),   # batch is the fast axis -> the weight tile
            in_specs=[                      # stays VMEM-resident across the batch loop.
                pl.BlockSpec((nb, HW, C_in), lambda c, n: (n, 0, 0)),   # x    (bf16)
                pl.BlockSpec((C_in, cb),     lambda c, n: (0, c)),      # w    (bf16)
                pl.BlockSpec((1, cb),        lambda c, n: (0, c)),      # bias (f32)
            ],
            out_specs=pl.BlockSpec((nb, cb), lambda c, n: (n, c)),
        ),
        compiler_params=pltpu.CompilerParams(
            dimension_semantics=("parallel", "parallel")),
    )(x, w, bias)                                                       # (N, C_out)

    # Dropout(p=0.0) is identity at inference.  Final fc (C_out -> num_classes) is tiny
    # and lane-sparse, so it runs in plain XLA.
    return pooled @ fc_w.T + fc_b


def _reference_f32(x_nchw, conv_w, bn_gamma, bn_beta, bn_mean, bn_var, fc_w, fc_b,
                   bn_eps=1e-3):
    # Literal eval-mode PyTorch semantics in f32.
    N, C_in, H, W = x_nchw.shape
    C_out = conv_w.shape[0]
    x = jnp.transpose(x_nchw, (0, 2, 3, 1))                             # NHWC
    y = jnp.einsum('nhwc,oc->nhwo', x, conv_w.reshape(C_out, C_in))
    y = (y - bn_mean) / jnp.sqrt(bn_var + bn_eps) * bn_gamma + bn_beta
    y = y * jax.nn.sigmoid(y)
    pooled = jnp.mean(y, axis=(1, 2))                                   # (N, C_out)
    return pooled @ fc_w.T + fc_b


def _reference_bf16_matched(x_nchw, conv_w, bn_gamma, bn_beta, bn_mean, bn_var,
                            fc_w, fc_b, bn_eps=1e-3):
    # Same operand quantization as the kernel (bf16 x, bf16 folded weight, f32 math).
    N, C_in, H, W = x_nchw.shape
    C_out = conv_w.shape[0]
    scale = bn_gamma / jnp.sqrt(bn_var + bn_eps)
    wq = (conv_w.reshape(C_out, C_in) * scale[:, None]).astype(jnp.bfloat16).astype(jnp.float32)
    xq = x_nchw.reshape(N, C_in, H * W).astype(jnp.bfloat16).astype(jnp.float32)
    bias = bn_beta - bn_mean * scale
    y = jnp.einsum('oc,nci->noi', wq, xq) + bias[None, :, None]
    y = y * jax.nn.sigmoid(y)
    pooled = jnp.mean(y, axis=-1)                                       # (N, C_out)
    return pooled @ fc_w.T + fc_b


if __name__ == "__main__":
    # Small shapes consistent with the module structure:
    # conv_head: Conv2d(3*in_channels -> out_channels, k=1, bias=False), fc: out_channels -> 2.
    # (Real b4 head is 1344 -> 1792 -> 2; scaled down here.)
    N, in_ch, H, W = 2, 8, 8, 8
    C_in = 3 * in_ch            # 24
    C_out = 128                 # round_filters(1280, ...) analogue, kept small
    NUM_CLASSES = 2             # num_out_classes in CLASS_model

    key = jax.random.PRNGKey(0)
    k = jax.random.split(key, 8)
    x = jax.random.normal(k[0], (N, C_in, H, W), jnp.float32)
    conv_w = jax.random.normal(k[1], (C_out, C_in, 1, 1), jnp.float32) * 0.05
    bn_gamma = 1.0 + 0.1 * jax.random.normal(k[2], (C_out,), jnp.float32)
    bn_beta = 0.1 * jax.random.normal(k[3], (C_out,), jnp.float32)
    bn_mean = 0.1 * jax.random.normal(k[4], (C_out,), jnp.float32)
    bn_var = jnp.abs(jax.random.normal(k[5], (C_out,), jnp.float32)) + 0.5
    fc_w = jax.random.normal(k[6], (NUM_CLASSES, C_out), jnp.float32) * 0.05
    fc_b = 0.1 * jax.random.normal(k[7], (NUM_CLASSES,), jnp.float32)

    out = class_model_forward(x, conv_w, bn_gamma, bn_beta, bn_mean, bn_var,
                              fc_w, fc_b)
    out = jax.block_until_ready(out)
    assert out.shape == (N, NUM_CLASSES)

    # Semantic check vs. the f32 eval-mode reference (tolerance sized for the bf16
    # operand rounding of the conv matmul), plus a tight check vs. a reference that
    # applies the exact same bf16 quantization as the kernel.
    ref32 = _reference_f32(x, conv_w, bn_gamma, bn_beta, bn_mean, bn_var, fc_w, fc_b)
    refq = _reference_bf16_matched(x, conv_w, bn_gamma, bn_beta, bn_mean, bn_var,
                                   fc_w, fc_b)
    assert jnp.allclose(out, ref32, atol=2e-2, rtol=2e-2)
    assert jnp.allclose(out, refq, atol=1e-3, rtol=1e-3)
    print("KERNEL_OK")
</pallas_src>

<mosaic_0001>
module attributes {stable_mosaic.version = 11 : i64} {
  func.func @_head_pool_kernel(%arg0: i32, %arg1: i32, %arg2: memref<2x64x24xbf16, #tpu.memory_space<vmem>>, %arg3: memref<24x128xbf16, #tpu.memory_space<vmem>>, %arg4: memref<1x128xf32, #tpu.memory_space<vmem>>, %arg5: memref<2x128xf32, #tpu.memory_space<vmem>>) attributes {dimension_semantics = [#tpu.dimension_semantics<parallel>, #tpu.dimension_semantics<parallel>], iteration_bounds = array<i64: 1, 1>, scalar_prefetch = 0 : i64, scratch_operands = 0 : i64, tpu.core_type = #tpu.core_type<tc>, window_params = [{transform_indices = @transform_0, window_bounds = array<i64: 2, 64, 24>}, {transform_indices = @transform_1, window_bounds = array<i64: 24, 128>}, {transform_indices = @transform_2, window_bounds = array<i64: 1, 128>}, {transform_indices = @transform_3, window_bounds = array<i64: 2, 128>}]} {
    %c0 = arith.constant 0 : index
    %c0_0 = arith.constant 0 : index
    %c0_1 = arith.constant 0 : index
    %0 = vector.load %arg2[%c0, %c0_0, %c0_1] : memref<2x64x24xbf16, #tpu.memory_space<vmem>>, vector<2x64x24xbf16>
    %1 = vector.shape_cast %0 : vector<2x64x24xbf16> to vector<128x24xbf16>
    %c0_2 = arith.constant 0 : index
    %c0_3 = arith.constant 0 : index
    %2 = vector.load %arg3[%c0_2, %c0_3] : memref<24x128xbf16, #tpu.memory_space<vmem>>, vector<24x128xbf16>
    %cst = arith.constant dense<0.000000e+00> : vector<128x128xf32>
    %3 = tpu.matmul %1, %2, %cst {dimension_numbers = #tpu.dot_dimension_numbers<[1], [0], [0], [1], [0, 0, 1, 1], [], []>} : vector<128x24xbf16>, vector<24x128xbf16>, vector<128x128xf32> -> vector<128x128xf32>
    %c0_4 = arith.constant 0 : index
    %c0_5 = arith.constant 0 : index
    %4 = vector.load %arg4[%c0_4, %c0_5] : memref<1x128xf32, #tpu.memory_space<vmem>>, vector<1x128xf32>
    %5 = vector.broadcast %4 : vector<1x128xf32> to vector<128x128xf32>
    %6 = arith.addf %3, %5 : vector<128x128xf32>
    %7 = arith.negf %6 : vector<128x128xf32>
    %8 = math.exp %7 : vector<128x128xf32>
    %cst_6 = arith.constant 1.000000e+00 : f32
    %9 = vector.broadcast %cst_6 : f32 to vector<128x128xf32>
    %10 = arith.addf %9, %8 : vector<128x128xf32>
    %11 = arith.divf %9, %10 : vector<128x128xf32>
    %12 = arith.mulf %6, %11 : vector<128x128xf32>
    %13 = vector.shape_cast %12 : vector<128x128xf32> to vector<2x64x128xf32>
    %cst_7 = arith.constant dense<0.000000e+00> : vector<2x128xf32>
    %14 = vector.multi_reduction <add>, %13, %cst_7 [1] : vector<2x64x128xf32> to vector<2x128xf32>
    %cst_8 = arith.constant 6.400000e+01 : f32
    %15 = vector.broadcast %cst_8 : f32 to vector<2x128xf32>
    %16 = arith.divf %14, %15 : vector<2x128xf32>
    %c0_9 = arith.constant 0 : index
    %c0_10 = arith.constant 0 : index
    %17 = vector.load %arg5[%c0_9, %c0_10] : memref<2x128xf32, #tpu.memory_space<vmem>>, vector<2x128xf32>
    tpu.vector_store %arg5[%c0_9, %c0_10], %16 {strides = array<i32>} : memref<2x128xf32, #tpu.memory_space<vmem>>, vector<2x128xf32>,
    return
  }
  func.func @transform_0(%arg0: i32, %arg1: i32) -> (i32, i32, i32) {
    %c0_i32 = arith.constant 0 : i32
    %c0_i32_0 = arith.constant 0 : i32
    %c0_i32_1 = arith.constant 0 : i32
    return %arg1, %c0_i32, %c0_i32_0 : i32, i32, i32
  }
  func.func @transform_1(%arg0: i32, %arg1: i32) -> (i32, i32) {
    %c0_i32 = arith.constant 0 : i32
    %c0_i32_0 = arith.constant 0 : i32
    return %c0_i32, %arg0 : i32, i32
  }
  func.func @transform_2(%arg0: i32, %arg1: i32) -> (i32, i32) {
    %c0_i32 = arith.constant 0 : i32
    %c0_i32_0 = arith.constant 0 : i32
    return %c0_i32, %arg0 : i32, i32
  }
  func.func @transform_3(%arg0: i32, %arg1: i32) -> (i32, i32) {
    %c0_i32 = arith.constant 0 : i32
    return %arg1, %arg0 : i32, i32
  }
}

</mosaic_0001>

<llo_original>
// kernel: tpu_custom_call.1
$region0: #{tpu_custom_call.1}
  #allocation0 [shape = 'u32[]', space=smem, size = 0x4, offset = 0x4, fixed_abs, tag = 'smem constant byte address 0x4 - core index']
  #allocation1 [shape = 'u32[144,128]{1,0:T(1,128)}', space=vmem, size = 0x12000, scoped, tag = 'internal scratch']
  %s0 = inlined_call_operand.vmem [shape: bf16[2,64,24], index: 0, kind: input, shape index: {}]
  %s1 = inlined_call_operand.vmem [shape: bf16[24,128], index: 1, kind: input, shape index: {}]
  %s2 = inlined_call_operand.vmem [shape: f32[1,128], index: 2, kind: input, shape index: {}]
  %s3 = inlined_call_operand.hbm [shape: f32[2,128], index: 3, kind: output, shape index: {}]
  %s4 = sld [smem:[#allocation0]]
  $region22: #{tpu_custom_call.1} parent=0
    _
  %s6 = ssub.s32 1, %s4
  %s7 = scalar_select 0, %s6, %s4
  $region1: #{tpu_custom_call.1} parent=0
    #allocation2 [shape = 'u8[1024]{0}', space=vmem, size = 0x400, scoped, tag = 'output window, operand 0, single buffered']
    #allocation3 [shape = 's32[1]{0}', space=sflag, size = 0x4, scoped, tag = 'scoped memory for tpu_custom_call.1']
    %8 = vsyncpa [#allocation3], 0
    // Predicated region
    $region2: #{tpu_custom_call.1} parent=1 // pred_check
      _
    $region3: #{tpu_custom_call.1} parent=1 // pred_check_branch
      %10 = sbr.rel (0) target = $region5
    $region4: #{tpu_custom_call.1} parent=1 // pred_region
      _
    $region5: #{tpu_custom_call.1} parent=1 // pred_fallthru
      _
    // Predicated region
    $region6: #{tpu_custom_call.1} parent=1 // pred_check
      _
    $region7: #{tpu_custom_call.1} parent=1 // pred_check_branch
      %12 = sbr.rel (0) target = $region9
    $region8: #{tpu_custom_call.1} parent=1 // pred_region
      _
    $region9: #{tpu_custom_call.1} parent=1 // pred_fallthru
      _
    // Predicated region
    $region10: #{tpu_custom_call.1} parent=1 // pred_check
      _
    $region11: #{tpu_custom_call.1} parent=1 // pred_check_branch
      %14 = sbr.rel (0) target = $region13
    $region12: #{tpu_custom_call.1} parent=1 // pred_region
      _
    $region13: #{tpu_custom_call.1} parent=1 // pred_fallthru
      _
    %v16 = vld [vmem:[%s0] sm:$0xf]
    %v17 = vld [vmem:[%s0 + $0x4] sm:$0xf]
    %v18 = vld [vmem:[%s0 + $0x8] sm:$0xf]
    %v19 = vld [vmem:[%s0 + $0xc] sm:$0xf]
    %v20 = vld [vmem:[%s0 + $0x10] sm:$0xf]
    %v21 = vld [vmem:[%s0 + $0x14] sm:$0xf]
    %v22 = vld [vmem:[%s0 + $0x18] sm:$0xf]
    %v23 = vld [vmem:[%s0 + $0x1c] sm:$0xf]
    %v24 = vld [vmem:[%s0 + $0x20] sm:$0xf]
    %v25 = vld [vmem:[%s0 + $0x24] sm:$0xf]
    %v26 = vld [vmem:[%s0 + $0x28] sm:$0xf]
    %v27 = vld [vmem:[%s0 + $0x2c] sm:$0xf]
    %v28 = vld [vmem:[%s0 + $0x30] sm:$0xf]
    %v29 = vld [vmem:[%s0 + $0x34] sm:$0xf]
    %v30 = vld [vmem:[%s0 + $0x38] sm:$0xf]
    %v31 = vld [vmem:[%s0 + $0x3c] sm:$0xf]
    %v32 = vld [vmem:[%s1] sm:$0xf]
    %v33 = vld [vmem:[%s1 + $0x4] sm:$0xf]
    %v34 = vld [vmem:[%s1 + $0x8] sm:$0xf]
    %v35 = vld [vmem:[%s2] sm:$0x1]
    %v37 = vlaneseq
    %v38 = vshrl.u32 %v37, 7
    %v39 = vsub.s32 0, %v38
    %v40 = vrot.slane %v35, %v39
    %v58 = vunpack.c.l.b16 %v16
    %v59 = vunpack.c.l.b16 %v17
    %v60 = vunpack.c.l.b16 %v18
    %v61 = vunpack.c.l.b16 %v19
    %v62 = vunpack.c.l.b16 %v20
    %v63 = vunpack.c.l.b16 %v21
    %v64 = vunpack.c.l.b16 %v22
    %v65 = vunpack.c.l.b16 %v23
    %v66 = vunpack.c.l.b16 %v24
    %v67 = vunpack.c.l.b16 %v25
    %v68 = vunpack.c.l.b16 %v26
    %v69 = vunpack.c.l.b16 %v27
    %v70 = vunpack.c.l.b16 %v28
    %v71 = vunpack.c.l.b16 %v29
    %v72 = vunpack.c.l.b16 %v30
    %v73 = vunpack.c.l.b16 %v31
    %v74 = vpack.c.b16 %v59, %v58
    %v75 = vpack.c.b16 %v61, %v60
    %v76 = vpack.c.b16 %v63, %v62
    %v77 = vpack.c.b16 %v65, %v64
    %v78 = vpack.c.b16 %v67, %v66
    %v79 = vpack.c.b16 %v69, %v68
    %v80 = vpack.c.b16 %v71, %v70
    %v81 = vpack.c.b16 %v73, %v72
    %v85 = vunpack.c.l.b16 %v32
    %v86 = vunpack.c.l.b16 %v33
    %v87 = vunpack.c.l.b16 %v34
    %v88 = vpack.c.b16 %v86, %v85
    %v89 = vpack.c.b16 %v87, %v87
    %vm91 = vcmask 195584
    %v93 = vsel %vm91, %v74, 0
    %v96 = vsel %vm91, %v75, 0
    %v99 = vsel %vm91, %v76, 0
    %v102 = vsel %vm91, %v77, 0
    %v105 = vsel %vm91, %v78, 0
    %v108 = vsel %vm91, %v79, 0
    %v111 = vsel %vm91, %v80, 0
    %v114 = vsel %vm91, %v81, 0
    %vm116 = vcmask 1043456
    %v118 = vsel %vm116, %v89, 0
    %120 = vmatprep.subr.bf16.mxu0 0
    %121 = vmatpush1.bf16.msra.mxu0 0
    %122 = vmatprep.subr.bf16.mxu0 0
    %123 = vmatpush1.bf16.msra.mxu0 0
    %124 = vmatprep.subr.bf16.mxu0 0
    %125 = vmatpush1.bf16.msra.mxu0 0
    %126 = vmatprep.subr.bf16.mxu0 0
    %127 = vmatpush1.bf16.msra.mxu0 0
    %128 = vmatprep.subr.bf16.mxu0 0
    %129 = vmatpush1.bf16.msra.mxu0 0
    %130 = vmatprep.subr.bf16.mxu0 0
    %131 = vmatpush1.bf16.msra.mxu0 0
    %132 = vmatprep.subr.bf16.mxu0 0
    %133 = vmatpush1.bf16.msra.mxu0 %v118
    %134 = vmatprep.subr.bf16.mxu0 0
    %135 = vmatpush1.bf16.msra.mxu0 %v88
    %136 = vmatprep.subr.bf16.mxu0 0
    %137 = vmatpush2.bf16.msra.mxu0 0
    %138 = vmatprep.subr.bf16.mxu0 0
    %139 = vmatpush2.bf16.msra.mxu0 0
    %140 = vmatprep.subr.bf16.mxu0 0
    %141 = vmatpush2.bf16.msra.mxu0 0
    %142 = vmatprep.subr.bf16.mxu0 0
    %143 = vmatpush2.bf16.msra.mxu0 0
    %144 = vmatprep.subr.bf16.mxu0 0
    %145 = vmatpush2.bf16.msra.mxu0 0
    %146 = vmatprep.subr.bf16.mxu0 0
    %147 = vmatpush2.bf16.msra.mxu0 0
    %148 = vmatprep.subr.bf16.mxu0 0
    %149 = vmatpush2.bf16.msra.mxu0 0
    %150 = vmatprep.subr.bf16.mxu0 0
    %151 = vmatpush2.bf16.msra.mxu0 0
    %152 = vmatprep.mubr.bf16.mxu0 0
    %153 = vmatmul.mubr.bf16.gmra.mxu0 %v93
    %v154 = vpop.f32.mrf.mxu0
    %v155 = vadd.f32 %v40, %v154
    %v156 = vpop.f32.mrf.mxu0
    %v157 = vpop.f32.mrf.mxu0
    %v158 = vadd.f32 %v40, %v157
    %v159 = vpop.f32.mrf.mxu0
    %160 = vmatprep.mubr.bf16.mxu0 0
    %161 = vmatmul.mubr.bf16.gmra.mxu0 %v96
    %v162 = vpop.f32.mrf.mxu0
    %v163 = vadd.f32 %v40, %v162
    %v164 = vpop.f32.mrf.mxu0
    %v165 = vpop.f32.mrf.mxu0
    %v166 = vadd.f32 %v40, %v165
    %v167 = vpop.f32.mrf.mxu0
    %168 = vmatprep.mubr.bf16.mxu0 0
    %169 = vmatmul.mubr.bf16.gmra.mxu0 %v99
    %v170 = vpop.f32.mrf.mxu0
    %v171 = vadd.f32 %v40, %v170
    %v172 = vpop.f32.mrf.mxu0
    %v173 = vpop.f32.mrf.mxu0
    %v174 = vadd.f32 %v40, %v173
    %v175 = vpop.f32.mrf.mxu0
    %176 = vmatprep.mubr.bf16.mxu0 0
    %177 = vmatmul.mubr.bf16.gmra.mxu0 %v102
    %v178 = vpop.f32.mrf.mxu0
    %v179 = vadd.f32 %v40, %v178
    %v180 = vpop.f32.mrf.mxu0
    %v181 = vpop.f32.mrf.mxu0
    %v182 = vadd.f32 %v40, %v181
    %v183 = vpop.f32.mrf.mxu0
    %184 = vmatprep.mubr.bf16.mxu0 0
    %185 = vmatmul.mubr.bf16.gmra.mxu0 %v105
    %v186 = vpop.f32.mrf.mxu0
    %v187 = vadd.f32 %v40, %v186
    %v188 = vpop.f32.mrf.mxu0
    %v189 = vpop.f32.mrf.mxu0
    %v190 = vadd.f32 %v40, %v189
    %v191 = vpop.f32.mrf.mxu0
    %192 = vmatprep.mubr.bf16.mxu0 0
    %193 = vmatmul.mubr.bf16.gmra.mxu0 %v108
    %v194 = vpop.f32.mrf.mxu0
    %v195 = vadd.f32 %v40, %v194
    %v196 = vpop.f32.mrf.mxu0
    %v197 = vpop.f32.mrf.mxu0
    %v198 = vadd.f32 %v40, %v197
    %v199 = vpop.f32.mrf.mxu0
    %200 = vmatprep.mubr.bf16.mxu0 0
    %201 = vmatmul.mubr.bf16.gmra.mxu0 %v111
    %v202 = vpop.f32.mrf.mxu0
    %v203 = vadd.f32 %v40, %v202
    %v204 = vpop.f32.mrf.mxu0
    %v205 = vpop.f32.mrf.mxu0
    %v206 = vadd.f32 %v40, %v205
    %v207 = vpop.f32.mrf.mxu0
    %208 = vmatprep.mubr.bf16.mxu0 0
    %209 = vmatmul.mubr.bf16.gmra.mxu0 %v114
    %v210 = vpop.f32.mrf.mxu0
    %v211 = vadd.f32 %v40, %v210
    %v212 = vpop.f32.mrf.mxu0
    %v213 = vpop.f32.mrf.mxu0
    %v214 = vadd.f32 %v40, %v213
    %v215 = vpop.f32.mrf.mxu0
    %216 = vdwg.mxu0
    %v217 = vxor.u32 %v155, 2147483648
    %v218 = vxor.u32 %v158, 2147483648
    %v219 = vxor.u32 %v163, 2147483648
    %v220 = vxor.u32 %v166, 2147483648
    %v221 = vxor.u32 %v171, 2147483648
    %v222 = vxor.u32 %v174, 2147483648
    %v223 = vxor.u32 %v179, 2147483648
    %v224 = vxor.u32 %v182, 2147483648
    %v225 = vxor.u32 %v187, 2147483648
    %v226 = vxor.u32 %v190, 2147483648
    %v227 = vxor.u32 %v195, 2147483648
    %v228 = vxor.u32 %v198, 2147483648
    %v229 = vxor.u32 %v203, 2147483648
    %v230 = vxor.u32 %v206, 2147483648
    %v231 = vxor.u32 %v211, 2147483648
    %v232 = vxor.u32 %v214, 2147483648
    %v233 = vmul.f32 %v217, 1.442695
    %v234 = vpow.pop %v233
    %v235 = vmul.f32 %v218, 1.442695
    %v236 = vpow.pop %v235
    %v237 = vmul.f32 %v219, 1.442695
    %v238 = vpow.pop %v237
    %v239 = vmul.f32 %v220, 1.442695
    %v240 = vpow.pop %v239
    %v241 = vmul.f32 %v221, 1.442695
    %v242 = vpow.pop %v241
    %v243 = vmul.f32 %v222, 1.442695
    %v244 = vpow.pop %v243
    %v245 = vmul.f32 %v223, 1.442695
    %v246 = vpow.pop %v245
    %v247 = vmul.f32 %v224, 1.442695
    %v248 = vpow.pop %v247
    %v249 = vmul.f32 %v225, 1.442695
    %v250 = vpow.pop %v249
    %v251 = vmul.f32 %v226, 1.442695
    %v252 = vpow.pop %v251
    %v253 = vmul.f32 %v227, 1.442695
    %v254 = vpow.pop %v253
    %v255 = vmul.f32 %v228, 1.442695
    %v256 = vpow.pop %v255
    %v257 = vmul.f32 %v229, 1.442695
    %v258 = vpow.pop %v257
    %v259 = vmul.f32 %v230, 1.442695
    %v260 = vpow.pop %v259
    %v261 = vmul.f32 %v231, 1.442695
    %v262 = vpow.pop %v261
    %v263 = vmul.f32 %v232, 1.442695
    %v264 = vpow.pop %v263
    %v265 = vadd.f32 %v234, 1.0
    %v266 = vadd.f32 %v236, 1.0
    %v267 = vadd.f32 %v238, 1.0
    %v268 = vadd.f32 %v240, 1.0
    %v269 = vadd.f32 %v242, 1.0
    %v270 = vadd.f32 %v244, 1.0
    %v271 = vadd.f32 %v246, 1.0
    %v272 = vadd.f32 %v248, 1.0
    %v273 = vadd.f32 %v250, 1.0
    %v274 = vadd.f32 %v252, 1.0
    %v275 = vadd.f32 %v254, 1.0
    %v276 = vadd.f32 %v256, 1.0
    %v277 = vadd.f32 %v258, 1.0
    %v278 = vadd.f32 %v260, 1.0
    %v279 = vadd.f32 %v262, 1.0
    %v280 = vadd.f32 %v264, 1.0
    %v281 = vrcp.pop %v265
    %v282 = vmul.f32 1.0, %v281
    %v283 = vrcp.pop %v266
    %v284 = vmul.f32 1.0, %v283
    %v285 = vrcp.pop %v267
    %v286 = vmul.f32 1.0, %v285
    %v287 = vrcp.pop %v268
    %v288 = vmul.f32 1.0, %v287
    %v289 = vrcp.pop %v269
    %v290 = vmul.f32 1.0, %v289
    %v291 = vrcp.pop %v270
    %v292 = vmul.f32 1.0, %v291
    %v293 = vrcp.pop %v271
    %v294 = vmul.f32 1.0, %v293
    %v295 = vrcp.pop %v272
    %v296 = vmul.f32 1.0, %v295
    %v297 = vrcp.pop %v273
    %v298 = vmul.f32 1.0, %v297
    %v299 = vrcp.pop %v274
    %v300 = vmul.f32 1.0, %v299
    %v301 = vrcp.pop %v275
    %v302 = vmul.f32 1.0, %v301
    %v303 = vrcp.pop %v276
    %v304 = vmul.f32 1.0, %v303
    %v305 = vrcp.pop %v277
    %v306 = vmul.f32 1.0, %v305
    %v307 = vrcp.pop %v278
    %v308 = vmul.f32 1.0, %v307
    %v309 = vrcp.pop %v279
    %v310 = vmul.f32 1.0, %v309
    %v311 = vrcp.pop %v280
    %v312 = vmul.f32 1.0, %v311
    %v313 = vmul.f32 %v155, %v282
    %v314 = vmul.f32 %v158, %v284
    %v315 = vmul.f32 %v163, %v286
    %v316 = vmul.f32 %v166, %v288
    %v317 = vmul.f32 %v171, %v290
    %v318 = vmul.f32 %v174, %v292
    %v319 = vmul.f32 %v179, %v294
    %v320 = vmul.f32 %v182, %v296
    %v321 = vmul.f32 %v187, %v298
    %v322 = vmul.f32 %v190, %v300
    %v323 = vmul.f32 %v195, %v302
    %v324 = vmul.f32 %v198, %v304
    %v325 = vmul.f32 %v203, %v306
    %v326 = vmul.f32 %v206, %v308
    %v327 = vmul.f32 %v211, %v310
    %v328 = vmul.f32 %v214, %v312
    %v329 = vadd.f32 %v313, %v314
    %v330 = vadd.f32 %v329, %v315
    %v331 = vadd.f32 %v330, %v316
    %v332 = vadd.f32 %v331, %v317
    %v333 = vadd.f32 %v332, %v318
    %v334 = vadd.f32 %v333, %v319
    %v335 = vadd.f32 %v334, %v320
    %v336 = vrot.slane %v335, 4
    %v337 = vadd.f32 %v335, %v336
    %v338 = vrot.slane %v337, 2
    %v339 = vadd.f32 %v337, %v338
    %v340 = vrot.slane %v339, 1
    %v341 = vadd.f32 %v339, %v340
    %v342 = vadd.f32 %v321, %v322
    %v343 = vadd.f32 %v342, %v323
    %v344 = vadd.f32 %v343, %v324
    %v345 = vadd.f32 %v344, %v325
    %v346 = vadd.f32 %v345, %v326
    %v347 = vadd.f32 %v346, %v327
    %v348 = vadd.f32 %v347, %v328
    %v349 = vrot.slane %v348, 4
    %v350 = vadd.f32 %v348, %v349
    %v351 = vrot.slane %v350, 2
    %v352 = vadd.f32 %v350, %v351
    %v353 = vrot.slane %v352, 1
    %v354 = vadd.f32 %v352, %v353
    %v355 = vrcp.pop 64.0
    %v356 = vmul.f32 %v341, %v355
    %v357 = vmul.f32 %v354, %v355
    %vm360 = vcmask 1041409
    %v361 = vsel %vm360, %v357, %v356
    %363 = vst [vmem:[#allocation2] sm:$0x3] %v361
    // Predicated region
    $region14: #{tpu_custom_call.1} parent=1 // pred_check
      _
    $region15: #{tpu_custom_call.1} parent=1 // pred_check_branch
      %365 = sbr.rel (0) target = $region17
    $region16: #{tpu_custom_call.1} parent=1 // pred_region
      %s367 = ssub.s32 32, 32
      %368 = vsyncadd [#allocation3], %s367
      %s370 = sshll.u32 [#allocation2], 4
      %s371 = int_to_ptr.vmem [resolvable:$true] %s370
      %373 = dma.vmem_to_hbm [thread:$0]  %s371, 32, %s3, [#allocation3]
    $region17: #{tpu_custom_call.1} parent=1 // pred_fallthru
      _
    // Predicated region
    $region18: #{tpu_custom_call.1} parent=1 // pred_check
      _
    $region19: #{tpu_custom_call.1} parent=1 // pred_check_branch
      %375 = sbr.rel (0) target = $region21
    $region20: #{tpu_custom_call.1} parent=1 // pred_region
      %376 = dma.done [#allocation3], 32
    $region21: #{tpu_custom_call.1} parent=1 // pred_fallthru
      _
    %377 = vsyncpa [#allocation3], 1

</llo_original>
